<compile_context>
chip_gen: v5e
topology: v5e:2x2
jax: 0.10.0
libtpu: 0.0.40
codegen_flags: <defaults>
</compile_context>

<pallas_src>
import jax
import jax.numpy as jnp
from jax.experimental import pallas as pl
from jax.experimental.pallas import tpu as pltpu


def _mlp_kernel(x_ref, w_ref, b_ref, o_ref, acc_ref):
    """x:(tm,tk)  w:(tn,tk) in nn.Linear (out,in) layout  b:(1,tn)  o:(tm,tn)."""
    k = pl.program_id(2)

    @pl.when(k == 0)
    def _():
        acc_ref[...] = jnp.zeros_like(acc_ref)

    # y[m, n] += sum_k x[m, k] * w[n, k]  == x @ w.T without materializing w.T
    acc_ref[...] += jax.lax.dot_general(
        x_ref[...], w_ref[...],
        dimension_numbers=(((1,), (1,)), ((), ())),
        preferred_element_type=jnp.float32)

    @pl.when(k == pl.num_programs(2) - 1)
    def _():
        y = acc_ref[...] + b_ref[...].astype(jnp.float32)   # f32 bias add (VPU)
        o_ref[...] = jnp.tanh(y).astype(o_ref.dtype)         # f32 tanh (EUP)


def _round_up(v, m):
    return ((v + m - 1) // m) * m


def _pick_feature_tile(h, requested, cap=512):
    """Hidden-axis tile: must divide H and be a multiple of 128, or be the
    full H (small / non-128-aligned hidden sizes)."""
    if requested is not None and h % requested == 0 and (
            requested % 128 == 0 or requested == h):
        return requested
    for t in (cap, 256, 128):
        if h % t == 0:
            return t
    return h


def mlp_layer(features, weight, bias, *, tile_m=None, tile_n=None,
              tile_k=None, compute_dtype=None):
    """y = tanh(features @ weight.T + bias).

    features: (B, H); weight: (H, H) in nn.Linear (out, in) layout; bias: (H,).
    compute_dtype: optional dtype (e.g. jnp.bfloat16) for the MXU inputs;
    accumulation / bias / tanh are always f32.
    """
    B, H = features.shape
    assert weight.shape == (H, H) and bias.shape == (H,)

    x = features if compute_dtype is None else features.astype(compute_dtype)
    w = weight if compute_dtype is None else weight.astype(compute_dtype)
    b2 = bias.reshape(1, H)

    # Batch tile: multiple of 8, capped at 256 rows.
    tm = min(_round_up(tile_m if tile_m is not None else 256, 8),
             _round_up(B, 8))
    tn = _pick_feature_tile(H, tile_n)
    tk = _pick_feature_tile(H, tile_k)

    grid = (pl.cdiv(B, tm), pl.cdiv(H, tn), pl.cdiv(H, tk))

    itemsize = jnp.dtype(x.dtype).itemsize
    cost = pl.CostEstimate(
        flops=2 * B * H * H,
        transcendentals=B * H,
        bytes_accessed=(B * H + H * H) * itemsize
        + H * jnp.dtype(b2.dtype).itemsize
        + B * H * jnp.dtype(features.dtype).itemsize)

    return pl.pallas_call(
        _mlp_kernel,
        out_shape=jax.ShapeDtypeStruct((B, H), features.dtype),
        grid_spec=pltpu.PrefetchScalarGridSpec(
            num_scalar_prefetch=0,
            grid=grid,
            in_specs=[
                pl.BlockSpec((tm, tk), lambda i, j, k: (i, k)),   # x tile
                pl.BlockSpec((tn, tk), lambda i, j, k: (j, k)),   # weight tile
                pl.BlockSpec((1, tn), lambda i, j, k: (0, j)),    # bias row
            ],
            out_specs=pl.BlockSpec((tm, tn), lambda i, j, k: (i, j)),
            scratch_shapes=[pltpu.VMEM((tm, tn), jnp.float32)],
        ),
        compiler_params=pltpu.CompilerParams(
            dimension_semantics=("parallel", "parallel", "arbitrary"),
            vmem_limit_bytes=32 * 1024 * 1024,
        ),
        cost_estimate=cost,
    )(x, w, b2)


if __name__ == "__main__":
    key = jax.random.PRNGKey(0)
    kx, kw, kb = jax.random.split(key, 3)

    # Small shape consistent with the module: batch=8, hidden=32.
    # (Note: at this size the kernel is per-step-overhead dominated; Pallas
    # only pays off at realistic hidden sizes, which the tiled path handles.)
    B, H = 8, 32
    features = jax.random.normal(kx, (B, H), dtype=jnp.float32)
    weight = jax.random.normal(kw, (H, H), dtype=jnp.float32) / jnp.sqrt(H)
    bias = jax.random.normal(kb, (H,), dtype=jnp.float32) * 0.01

    ref = jnp.tanh(features @ weight.T + bias)

    # f32 path (tight tolerance).
    out = jax.block_until_ready(mlp_layer(features, weight, bias))
    assert out.shape == (B, H)
    assert jnp.allclose(out, ref, atol=1e-5, rtol=1e-5)

    # bf16 MXU-input fast path (f32 accumulation / bias / tanh).
    out_bf16 = jax.block_until_ready(
        mlp_layer(features, weight, bias, compute_dtype=jnp.bfloat16))
    assert jnp.allclose(out_bf16, ref, atol=5e-2, rtol=5e-2)

    # Exercise the tiled (M, N, K) path with a multi-step grid (2, 2, 2).
    B2, H2 = 64, 256
    f2 = jax.random.normal(kx, (B2, H2), dtype=jnp.float32)
    w2 = jax.random.normal(kw, (H2, H2), dtype=jnp.float32) / jnp.sqrt(H2)
    b2 = jax.random.normal(kb, (H2,), dtype=jnp.float32) * 0.01
    ref2 = jnp.tanh(f2 @ w2.T + b2)
    out2 = jax.block_until_ready(
        mlp_layer(f2, w2, b2, tile_m=32, tile_n=128, tile_k=128))
    assert jnp.allclose(out2, ref2, atol=1e-4, rtol=1e-4)

    print("KERNEL_OK")
</pallas_src>

<mosaic_0001>
module attributes {stable_mosaic.version = 11 : i64} {
  func.func @_mlp_kernel(%arg0: i32, %arg1: i32, %arg2: i32, %arg3: memref<8x32xf32, #tpu.memory_space<vmem>>, %arg4: memref<32x32xf32, #tpu.memory_space<vmem>>, %arg5: memref<1x32xf32, #tpu.memory_space<vmem>>, %arg6: memref<8x32xf32, #tpu.memory_space<vmem>>, %arg7: memref<8x32xf32, #tpu.memory_space<vmem>>) attributes {dimension_semantics = [#tpu.dimension_semantics<parallel>, #tpu.dimension_semantics<parallel>, #tpu.dimension_semantics<arbitrary>], iteration_bounds = array<i64: 1, 1, 1>, scalar_prefetch = 0 : i64, scratch_operands = 1 : i64, tpu.core_type = #tpu.core_type<tc>, window_params = [{transform_indices = @transform_0, window_bounds = array<i64: 8, 32>}, {transform_indices = @transform_1, window_bounds = array<i64: 32, 32>}, {transform_indices = @transform_2, window_bounds = array<i64: 1, 32>}, {transform_indices = @transform_3, window_bounds = array<i64: 8, 32>}]} {
    %c0_i32 = arith.constant 0 : i32
    %0 = arith.cmpi eq, %arg2, %c0_i32 : i32
    %1 = arith.extui %0 : i1 to i32
    %c0_i32_0 = arith.constant 0 : i32
    %2 = arith.cmpi ne, %1, %c0_i32_0 : i32
    scf.if %2 {
      %cst_10 = arith.constant 0.000000e+00 : f32
      %12 = vector.broadcast %cst_10 : f32 to vector<8x32xf32>
      %c0_11 = arith.constant 0 : index
      %c0_12 = arith.constant 0 : index
      %13 = vector.load %arg7[%c0_11, %c0_12] : memref<8x32xf32, #tpu.memory_space<vmem>>, vector<8x32xf32>
      tpu.vector_store %arg7[%c0_11, %c0_12], %12 {strides = array<i32>} : memref<8x32xf32, #tpu.memory_space<vmem>>, vector<8x32xf32>,
    } else {
    }
    %c0 = arith.constant 0 : index
    %c0_1 = arith.constant 0 : index
    %3 = vector.load %arg7[%c0, %c0_1] : memref<8x32xf32, #tpu.memory_space<vmem>>, vector<8x32xf32>
    %c0_2 = arith.constant 0 : index
    %c0_3 = arith.constant 0 : index
    %4 = vector.load %arg3[%c0_2, %c0_3] : memref<8x32xf32, #tpu.memory_space<vmem>>, vector<8x32xf32>
    %c0_4 = arith.constant 0 : index
    %c0_5 = arith.constant 0 : index
    %5 = vector.load %arg4[%c0_4, %c0_5] : memref<32x32xf32, #tpu.memory_space<vmem>>, vector<32x32xf32>
    %cst = arith.constant dense<0.000000e+00> : vector<8x32xf32>
    %6 = tpu.matmul %4, %5, %cst {dimension_numbers = #tpu.dot_dimension_numbers<[1], [1], [0], [0], [0, 0, 1, 0], [], []>} : vector<8x32xf32>, vector<32x32xf32>, vector<8x32xf32> -> vector<8x32xf32>
    %7 = arith.addf %3, %6 : vector<8x32xf32>
    %c0_6 = arith.constant 0 : index
    %c0_7 = arith.constant 0 : index
    %8 = vector.load %arg7[%c0_6, %c0_7] : memref<8x32xf32, #tpu.memory_space<vmem>>, vector<8x32xf32>
    tpu.vector_store %arg7[%c0_6, %c0_7], %7 {strides = array<i32>} : memref<8x32xf32, #tpu.memory_space<vmem>>, vector<8x32xf32>,
    %c0_i32_8 = arith.constant 0 : i32
    %9 = arith.cmpi eq, %arg2, %c0_i32_8 : i32
    %10 = arith.extui %9 : i1 to i32
    %c0_i32_9 = arith.constant 0 : i32
    %11 = arith.cmpi ne, %10, %c0_i32_9 : i32
    scf.if %11 {
      %c0_10 = arith.constant 0 : index
      %c0_11 = arith.constant 0 : index
      %12 = vector.load %arg7[%c0_10, %c0_11] : memref<8x32xf32, #tpu.memory_space<vmem>>, vector<8x32xf32>
      %c0_12 = arith.constant 0 : index
      %c0_13 = arith.constant 0 : index
      %13 = vector.load %arg5[%c0_12, %c0_13] : memref<1x32xf32, #tpu.memory_space<vmem>>, vector<1x32xf32>
      %14 = vector.broadcast %13 : vector<1x32xf32> to vector<8x32xf32>
      %15 = arith.addf %12, %14 : vector<8x32xf32>
      %16 = math.tanh %15 : vector<8x32xf32>
      %c0_14 = arith.constant 0 : index
      %c0_15 = arith.constant 0 : index
      %17 = vector.load %arg6[%c0_14, %c0_15] : memref<8x32xf32, #tpu.memory_space<vmem>>, vector<8x32xf32>
      tpu.vector_store %arg6[%c0_14, %c0_15], %16 {strides = array<i32>} : memref<8x32xf32, #tpu.memory_space<vmem>>, vector<8x32xf32>,
    } else {
    }
    return
  }
  func.func @transform_0(%arg0: i32, %arg1: i32, %arg2: i32) -> (i32, i32) {
    %c0_i32 = arith.constant 0 : i32
    return %arg0, %arg2 : i32, i32
  }
  func.func @transform_1(%arg0: i32, %arg1: i32, %arg2: i32) -> (i32, i32) {
    %c0_i32 = arith.constant 0 : i32
    return %arg1, %arg2 : i32, i32
  }
  func.func @transform_2(%arg0: i32, %arg1: i32, %arg2: i32) -> (i32, i32) {
    %c0_i32 = arith.constant 0 : i32
    %c0_i32_0 = arith.constant 0 : i32
    return %c0_i32, %arg1 : i32, i32
  }
  func.func @transform_3(%arg0: i32, %arg1: i32, %arg2: i32) -> (i32, i32) {
    %c0_i32 = arith.constant 0 : i32
    return %arg0, %arg1 : i32, i32
  }
}

</mosaic_0001>

<llo_original>
// kernel: tpu_custom_call.1
$region0: #{tpu_custom_call.1}
  #allocation0 [shape = 'u32[]', space=smem, size = 0x4, offset = 0x4, fixed_abs, tag = 'smem constant byte address 0x4 - core index']
  #allocation1 [shape = 'u32[72,128]{1,0:T(1,128)}', space=vmem, size = 0x9000, scoped, tag = 'internal scratch']
  #allocation2 [shape = 'f32[8,32]{1,0:T(8,128)}', space=vmem, size = 0x1000, scoped, tag = 'scratch operand']
  %s0 = inlined_call_operand.hbm [shape: f32[8,32], index: 0, kind: input, shape index: {}]
  %s1 = inlined_call_operand.hbm [shape: f32[32,32], index: 1, kind: input, shape index: {}]
  %s2 = inlined_call_operand.vmem [shape: f32[1,32], index: 2, kind: input, shape index: {}]
  %s3 = inlined_call_operand.hbm [shape: f32[8,32], index: 3, kind: output, shape index: {}]
  %s4 = sld [smem:[#allocation0]]
  $region38: #{tpu_custom_call.1} parent=0
    _
  %s6 = ssub.s32 1, %s4
  %s7 = scalar_select 0, %s6, %s4
  $region1: #{tpu_custom_call.1} parent=0
    #allocation3 [shape = 'u8[4096]{0}', space=vmem, size = 0x1000, scoped, tag = 'input window, operand 0, single buffered']
    #allocation4 [shape = 's32[1]{0}', space=sflag, size = 0x4, scoped, tag = 'scoped memory for tpu_custom_call.1']
    #allocation5 [shape = 's32[1]{0}', space=sflag, size = 0x4, scoped, tag = 'scoped memory for tpu_custom_call.1']
    #allocation6 [shape = 'u8[16384]{0}', space=vmem, size = 0x4000, scoped, tag = 'input window, operand 1, single buffered']
    #allocation7 [shape = 's32[1]{0}', space=sflag, size = 0x4, scoped, tag = 'scoped memory for tpu_custom_call.1']
    #allocation8 [shape = 'u8[4096]{0}', space=vmem, size = 0x1000, scoped, tag = 'output window, operand 0, single buffered']
    %8 = vsyncpa [#allocation4], 0
    %9 = vsyncpa [#allocation7], 0
    %10 = vsyncpa [#allocation5], 0
    // Predicated region
    $region2: #{tpu_custom_call.1} parent=1 // pred_check
      _
    $region3: #{tpu_custom_call.1} parent=1 // pred_check_branch
      %12 = sbr.rel (0) target = $region5
    $region4: #{tpu_custom_call.1} parent=1 // pred_region
      %14 = vsyncadd [#allocation4], 0
      %s16 = sshll.u32 %s0, 4
      %s17 = int_to_ptr.hbm [resolvable:$true] %s16
      %s18 = sshll.u32 [#allocation3], 4
      %s19 = int_to_ptr.vmem [resolvable:$true] %s18
      %21 = dma.hbm_to_vmem [thread:$0]  %s17, 128, %s19, [#allocation4]
    $region5: #{tpu_custom_call.1} parent=1 // pred_fallthru
      _
    // Predicated region
    $region6: #{tpu_custom_call.1} parent=1 // pred_check
      _
    $region7: #{tpu_custom_call.1} parent=1 // pred_check_branch
      %23 = sbr.rel (0) target = $region9
    $region8: #{tpu_custom_call.1} parent=1 // pred_region
      %25 = vsyncadd [#allocation7], 0
      %s26 = sshll.u32 %s1, 4
      %s27 = int_to_ptr.hbm [resolvable:$true] %s26
      %s28 = sshll.u32 [#allocation6], 4
      %s29 = int_to_ptr.vmem [resolvable:$true] %s28
      %34 = dma.hbm_to_vmem [thread:$0]  %s27, 512, %s29, [#allocation7], 128, 128, 8
    $region9: #{tpu_custom_call.1} parent=1 // pred_fallthru
      _
    // Predicated region
    $region10: #{tpu_custom_call.1} parent=1 // pred_check
      _
    $region11: #{tpu_custom_call.1} parent=1 // pred_check_branch
      %36 = sbr.rel (0) target = $region13
    $region12: #{tpu_custom_call.1} parent=1 // pred_region
      _
    $region13: #{tpu_custom_call.1} parent=1 // pred_fallthru
      _
    // Predicated region
    $region14: #{tpu_custom_call.1} parent=1 // pred_check
      _
    $region15: #{tpu_custom_call.1} parent=1 // pred_check_branch
      %38 = sbr.rel (0) target = $region17
    $region16: #{tpu_custom_call.1} parent=1 // pred_region
      %40 = dma.done [#allocation4], 128
    $region17: #{tpu_custom_call.1} parent=1 // pred_fallthru
      _
    // Predicated region
    $region18: #{tpu_custom_call.1} parent=1 // pred_check
      _
    $region19: #{tpu_custom_call.1} parent=1 // pred_check_branch
      %42 = sbr.rel (0) target = $region21
    $region20: #{tpu_custom_call.1} parent=1 // pred_region
      %44 = dma.done [#allocation7], 512
    $region21: #{tpu_custom_call.1} parent=1 // pred_fallthru
      _
    %p45 = scmp.eq.s32.totalorder 0, 0
    // Predicated region
    $region22: #{tpu_custom_call.1} parent=1 // pred_check
      %p46 = pneg %p45
    $region23: #{tpu_custom_call.1} parent=1 // pred_check_branch
      %48 = sbr.rel (%p46) target = $region25
    $region24: #{tpu_custom_call.1} parent=1 // pred_region
      %vm49 = vcmask 261120
      %50 = vst.msk [vmem:[#allocation2] sm:$0xff] %vm49, 0.0
    $region25: #{tpu_custom_call.1} parent=1 // pred_fallthru
      _
    %v51 = vld [vmem:[#allocation2] sm:$0xff]
    %v52 = vld [vmem:[#allocation3] sm:$0xff]
    %v53 = vld [vmem:[#allocation6] sm:$0xff]
    %v54 = vld [vmem:[#allocation6 + $0x8] sm:$0xff]
    %v55 = vld [vmem:[#allocation6 + $0x10] sm:$0xff]
    %v56 = vld [vmem:[#allocation6 + $0x18] sm:$0xff]
    %vm57 = vcmask 261120
    %v59 = vsel %vm57, %v52, 0
    %v62 = vsel %vm57, %v53, 0
    %v65 = vsel %vm57, %v54, 0
    %v68 = vsel %vm57, %v55, 0
    %v71 = vsel %vm57, %v56, 0
    %73 = vmatpush.xpose.msra.mxu0 0.0
    %74 = vmatpush.xpose.msra.mxu0 0.0
    %75 = vmatpush.xpose.msra.mxu0 0.0
    %76 = vmatpush.xpose.msra.mxu0 0.0
    %77 = vmatpush.xpose.msra.mxu0 0.0
    %78 = vmatpush.xpose.msra.mxu0 0.0
    %79 = vmatpush.xpose.msra.mxu0 0.0
    %80 = vmatpush.xpose.msra.mxu0 0.0
    %81 = vmatpush.xpose.msra.mxu0 0.0
    %82 = vmatpush.xpose.msra.mxu0 0.0
    %83 = vmatpush.xpose.msra.mxu0 0.0
    %84 = vmatpush.xpose.msra.mxu0 0.0
    %85 = vmatpush.xpose.msra.mxu0 %v71
    %86 = vmatpush.xpose.msra.mxu0 %v68
    %87 = vmatpush.xpose.msra.mxu0 %v65
    %88 = vmatpush.xpose.msra.mxu0 %v62
    %89 = vmatmul.f32.gmra.mxu0 %v59
    %v90 = vpop.f32.mrf.mxu0
    %v91 = vadd.f32 0.0, %v90
    %92 = vdwg.mxu0
    %v93 = vadd.f32 %v51, %v91
    %94 = vst.msk [vmem:[#allocation2] sm:$0xff] %vm57, %v93
    // Predicated region
    $region26: #{tpu_custom_call.1} parent=1 // pred_check
      %p95 = pneg %p45
    $region27: #{tpu_custom_call.1} parent=1 // pred_check_branch
      %97 = sbr.rel (%p95) target = $region29
    $region28: #{tpu_custom_call.1} parent=1 // pred_region
      %v98 = vld [vmem:[#allocation2] sm:$0xff]
      %v99 = vld [vmem:[%s2] sm:$0x1]
      %v101 = vperm.slane %v99, 0
      %v103 = vadd.f32 %v98, %v101
      %v104 = vtanh.pop %v103
      %105 = vst.msk [vmem:[#allocation8] sm:$0xff] %vm57, %v104
    $region29: #{tpu_custom_call.1} parent=1 // pred_fallthru
      _
    // Predicated region
    $region30: #{tpu_custom_call.1} parent=1 // pred_check
      _
    $region31: #{tpu_custom_call.1} parent=1 // pred_check_branch
      %107 = sbr.rel (0) target = $region33
    $region32: #{tpu_custom_call.1} parent=1 // pred_region
      %109 = vsyncadd [#allocation5], 0
      %s111 = sshll.u32 [#allocation8], 4
      %s112 = int_to_ptr.vmem [resolvable:$true] %s111
      %s113 = sshll.u32 %s3, 4
      %s114 = int_to_ptr.hbm [resolvable:$true] %s113
      %116 = dma.vmem_to_hbm [thread:$0]  %s112, 128, %s114, [#allocation5]
    $region33: #{tpu_custom_call.1} parent=1 // pred_fallthru
      _
    // Predicated region
    $region34: #{tpu_custom_call.1} parent=1 // pred_check
      _
    $region35: #{tpu_custom_call.1} parent=1 // pred_check_branch
      %118 = sbr.rel (0) target = $region37
    $region36: #{tpu_custom_call.1} parent=1 // pred_region
      %120 = dma.done [#allocation5], 128
    $region37: #{tpu_custom_call.1} parent=1 // pred_fallthru
      _
    %121 = vsyncpa [#allocation4], 1
    %122 = vsyncpa [#allocation7], 1
    %123 = vsyncpa [#allocation5], 1

</llo_original>
